<compile_context>
chip_gen: v7x
topology: tpu7x:2x2x1
jax: 0.10.0
libtpu: 0.0.40
codegen_flags: <defaults>
</compile_context>

<pallas_src>
import jax
import jax.numpy as jnp
from jax.experimental import pallas as pl
from jax.experimental.pallas import tpu as pltpu

EPS = 1e-5  # torch.nn.BatchNorm1d default eps


def language_classifier(language):
    """Exact port of PhonemeMapper.language_classifer (pure Python glue)."""
    if language == 'fr':
        return 0.0
    if language == 'it':
        return 1.0
    codes = ((ord(letter) - ord('a')) / (ord('z') - ord('a')) + i
             for i, letter in enumerate(language))
    return (sum(codes) - 1) / 2


def phoneme_mapper_kernel(x_ref, w_ref, lw_ref, scale_ref, bias_ref, o_ref):
    """One batch tile: MXU matmul + folded BN / language epilogue.

    x_ref:     (Bt, S, F)      input frames (no language column)
    w_ref:     (F, P_pad)      classifier weight rows for features, lane-padded
    lw_ref:    (Bt, 1, P_pad)  lang[b] * W[:, 0], precomputed per batch element
    scale_ref: (1, S, 1)       gamma * rsqrt(var + eps) per BN channel
    bias_ref:  (1, S, P_pad)   (beta - scale*mean) * sum_d W[:, d] + b
    o_ref:     (Bt, S, P)      unpadded logits (only the first P lanes stored)
    """
    Bt, S, F = x_ref.shape
    Pp = w_ref.shape[1]
    P = o_ref.shape[-1]
    # (Bt*S, F) @ (F, P_pad) on the MXU, f32 accumulate.  The reshapes are pure
    # sublane relabels because the wrapper only takes this path when S % 8 == 0.
    x = x_ref[...].reshape(Bt * S, F)
    y = jnp.dot(x, w_ref[...], preferred_element_type=jnp.float32)
    y = y.reshape(Bt, S, Pp)
    y = y + lw_ref[...]                          # language-column rank-1 term
    y = y * scale_ref[...] + bias_ref[...]       # folded eval-mode BatchNorm
    # Store only the real phoneme lanes -> unpadded HBM writeback, no XLA slice.
    o_ref[...] = y[..., :P].astype(o_ref.dtype)


def phoneme_mapper_forward(input_values, language, params, *, min_pallas_rows=0):
    """JAX wrapper: fold params (cheap, f32), then a tiled lane-dense Pallas call.

    params = (gamma, beta, running_mean, running_var, W, b) in torch layout:
      gamma/beta/mean/var: (features_size,), W: (P, features_size), b: (P,).
    min_pallas_rows: rows (B*S) below which the pure-XLA path is used
      (production callers may set e.g. 2048; 0 forces the Pallas kernel).
    """
    gamma, beta, mean, var, w, b = params
    B, S, F = input_values.shape
    D = F + 1
    if S != D:
        raise ValueError(
            "PhonemeMapper requires dim 1 == features_size == last_dim + 1 "
            f"(got S={S}, F+1={D})")
    P = w.shape[0]
    P_pad = ((P + 127) // 128) * 128
    f32 = jnp.float32

    # --- glue: per-batch language scalar (mirrors input_batch[:, :, 0]) ---
    if isinstance(language, str):
        lang_vals = jnp.full((B,), language_classifier(language), dtype=f32)
    else:
        lang_vals = jnp.asarray([language_classifier(l) for l in language],
                                dtype=f32)

    # --- fold eval-mode BatchNorm + language column into the matmul epilogue
    #     (all tiny, all f32 — the (beta - scale*mean) cancellation is the
    #     numerically sensitive step, so upcast before folding) ---
    gamma = gamma.astype(f32)
    beta = beta.astype(f32)
    mean = mean.astype(f32)
    var = var.astype(f32)
    w_t = w.astype(f32).T                          # (D, P): logits = x_cat @ w_t + b
    scale = gamma * jax.lax.rsqrt(var + EPS)       # (S,)
    w_sum = jnp.sum(w_t, axis=0)                   # (P,) includes language column
    bias_s = ((beta - scale * mean)[:, None] * w_sum[None, :]
              + b.astype(f32)[None, :])            # (S, P)
    w0 = w_t[0:1, :]                               # (1, P) language-column weight
    w_feat = w_t[1:, :]                            # (F, P)

    # --- small-problem / awkward-shape fallback: a fused XLA dot is at least
    #     as fast at tiny sizes, and S % 8 != 0 would make the in-kernel
    #     reshapes materialize VMEM copies every grid step. ---
    if (B * S) < min_pallas_rows or (S % 8) != 0:
        y = jnp.einsum('bsf,fp->bsp', input_values.astype(f32), w_feat)
        y = y + lang_vals[:, None, None] * w0[None]
        y = y * scale[None, :, None] + bias_s[None]
        return y.astype(input_values.dtype)

    # Lane-pad the phoneme axis to a multiple of 128 for the in-VMEM matmul /
    # epilogue (native MXU N); the HBM output stays unpadded (P lanes stored).
    pad = P_pad - P
    if pad:
        w_feat_p = jnp.pad(w_feat, ((0, 0), (0, pad)))
        w0_p = jnp.pad(w0, ((0, 0), (0, pad)))
        bias_p = jnp.pad(bias_s, ((0, 0), (0, pad)))
    else:
        w_feat_p, w0_p, bias_p = w_feat, w0, bias_s

    lang_w0 = lang_vals[:, None, None] * w0_p[None]   # (B, 1, P_pad), a few KB
    scale3 = scale.reshape(1, S, 1)
    bias3 = bias_p.reshape(1, S, P_pad)

    # --- batch-tile size: target ~4K rows per step, and keep the double-
    #     buffered x + out blocks well under v5e's 16 MiB scoped-VMEM default
    #     (also comfortably inside v7x's 64 MiB physical VMEM). ---
    target_rows = 4096
    vmem_budget = 8 << 20                              # bytes for 2x(x + out)
    bytes_per_b = 2 * S * (F + P) * 4
    bt_rows = max(1, target_rows // max(S, 1))
    bt_vmem = max(1, vmem_budget // max(bytes_per_b, 1))
    Bt = max(1, min(B, bt_rows, bt_vmem))
    grid = (pl.cdiv(B, Bt),)

    cost = pl.CostEstimate(
        flops=2 * B * S * D * P,
        transcendentals=0,
        bytes_accessed=4 * (B * S * F + B * S * P + F * P_pad
                            + S * P_pad + B * P_pad + S),
    )

    out = pl.pallas_call(
        phoneme_mapper_kernel,
        out_shape=jax.ShapeDtypeStruct((B, S, P), input_values.dtype),
        grid=grid,
        in_specs=[
            pl.BlockSpec((Bt, S, F), lambda i: (i, 0, 0)),      # batch-tiled x
            pl.BlockSpec((F, P_pad), lambda i: (0, 0)),         # resident weights
            pl.BlockSpec((Bt, 1, P_pad), lambda i: (i, 0, 0)),  # per-batch lang term
            pl.BlockSpec((1, S, 1), lambda i: (0, 0, 0)),       # resident BN scale
            pl.BlockSpec((1, S, P_pad), lambda i: (0, 0, 0)),   # resident folded bias
        ],
        out_specs=pl.BlockSpec((Bt, S, P), lambda i: (i, 0, 0)),
        compiler_params=pltpu.CompilerParams(
            dimension_semantics=("parallel",)),   # v7x: split tiles across 2 TCs
        cost_estimate=cost,
    )(input_values, w_feat_p, lang_w0, scale3, bias3)

    return out


if __name__ == "__main__":
    features_size = 16
    num_phonemes = 32          # len(phonemes_dict)
    B = 2
    S = features_size          # BatchNorm1d channel dim
    F = features_size - 1      # raw feature dim before the language column

    key = jax.random.PRNGKey(0)
    k_in, k_w, k_b, k_g, k_be, k_m, k_v = jax.random.split(key, 7)

    input_values = jax.random.normal(k_in, (B, S, F), dtype=jnp.float32)

    # Non-trivial BatchNorm1d params / running stats (torch layout: (C,)).
    gamma = 1.0 + 0.1 * jax.random.normal(k_g, (features_size,), jnp.float32)
    beta = 0.1 * jax.random.normal(k_be, (features_size,), jnp.float32)
    running_mean = 0.1 * jax.random.normal(k_m, (features_size,), jnp.float32)
    running_var = jnp.abs(
        1.0 + 0.1 * jax.random.normal(k_v, (features_size,), jnp.float32))

    # Linear(features_size, num_phonemes) in torch layout: W (P, D), b (P,).
    bound = 1.0 / (features_size ** 0.5)
    w = jax.random.uniform(k_w, (num_phonemes, features_size),
                           jnp.float32, -bound, bound)
    b = jax.random.uniform(k_b, (num_phonemes,), jnp.float32, -bound, bound)

    languages = ["fr", "de"]   # per-batch-element languages
    params = (gamma, beta, running_mean, running_var, w, b)

    # min_pallas_rows=0 forces the Pallas path even at this toy size.
    logits = phoneme_mapper_forward(input_values, languages, params,
                                    min_pallas_rows=0)
    jax.block_until_ready(logits)

    # Pure-JAX reference of the eval-mode module (concat + BN + Linear).
    lang_vals = jnp.asarray([language_classifier(l) for l in languages],
                            jnp.float32)
    x_cat = jnp.concatenate(
        [jnp.broadcast_to(lang_vals[:, None, None], (B, S, 1)), input_values],
        axis=-1)
    inv_std = 1.0 / jnp.sqrt(running_var + EPS)
    hidden = ((x_cat - running_mean[None, :, None])
              * (gamma * inv_std)[None, :, None] + beta[None, :, None])
    ref = jnp.einsum('bsd,pd->bsp', hidden, w) + b[None, None, :]

    assert logits.shape == (B, S, num_phonemes)
    assert logits.dtype == jnp.float32
    assert jnp.allclose(logits, ref, atol=1e-4, rtol=1e-4), \
        float(jnp.max(jnp.abs(logits - ref)))
    print("KERNEL_OK")
</pallas_src>

<mosaic_0001>
module attributes {stable_mosaic.version = 11 : i64} {
  func.func @phoneme_mapper_kernel(%arg0: i32, %arg1: memref<2x16x15xf32, #tpu.memory_space<vmem>>, %arg2: memref<15x128xf32, #tpu.memory_space<vmem>>, %arg3: memref<2x1x128xf32, #tpu.memory_space<vmem>>, %arg4: memref<1x16x1xf32, #tpu.memory_space<vmem>>, %arg5: memref<1x16x128xf32, #tpu.memory_space<vmem>>, %arg6: memref<2x16x32xf32, #tpu.memory_space<vmem>>) attributes {dimension_semantics = [#tpu.dimension_semantics<parallel>], iteration_bounds = array<i64: 1>, scalar_prefetch = 0 : i64, scratch_operands = 0 : i64, tpu.core_type = #tpu.core_type<tc>, window_params = [{transform_indices = @transform_0, window_bounds = array<i64: 2, 16, 15>}, {pipeline_mode = #tpu.pipeline_mode<synchronous>, transform_indices = @transform_1, window_bounds = array<i64: 15, 128>}, {transform_indices = @transform_2, window_bounds = array<i64: 2, 1, 128>}, {pipeline_mode = #tpu.pipeline_mode<synchronous>, transform_indices = @transform_3, window_bounds = array<i64: 1, 16, 1>}, {pipeline_mode = #tpu.pipeline_mode<synchronous>, transform_indices = @transform_4, window_bounds = array<i64: 1, 16, 128>}, {transform_indices = @transform_5, window_bounds = array<i64: 2, 16, 32>}]} {
    %c0 = arith.constant 0 : index
    %c0_0 = arith.constant 0 : index
    %c0_1 = arith.constant 0 : index
    %0 = vector.load %arg1[%c0, %c0_0, %c0_1] : memref<2x16x15xf32, #tpu.memory_space<vmem>>, vector<2x16x15xf32>
    %1 = vector.shape_cast %0 : vector<2x16x15xf32> to vector<32x15xf32>
    %c0_2 = arith.constant 0 : index
    %c0_3 = arith.constant 0 : index
    %2 = vector.load %arg2[%c0_2, %c0_3] : memref<15x128xf32, #tpu.memory_space<vmem>>, vector<15x128xf32>
    %cst = arith.constant dense<0.000000e+00> : vector<32x128xf32>
    %3 = tpu.matmul %1, %2, %cst {dimension_numbers = #tpu.dot_dimension_numbers<[1], [0], [0], [1], [0, 0, 1, 1], [], []>} : vector<32x15xf32>, vector<15x128xf32>, vector<32x128xf32> -> vector<32x128xf32>
    %4 = vector.shape_cast %3 : vector<32x128xf32> to vector<2x16x128xf32>
    %c0_4 = arith.constant 0 : index
    %c0_5 = arith.constant 0 : index
    %c0_6 = arith.constant 0 : index
    %5 = vector.load %arg3[%c0_4, %c0_5, %c0_6] : memref<2x1x128xf32, #tpu.memory_space<vmem>>, vector<2x1x128xf32>
    %6 = vector.broadcast %5 : vector<2x1x128xf32> to vector<2x16x128xf32>
    %7 = arith.addf %4, %6 : vector<2x16x128xf32>
    %c0_7 = arith.constant 0 : index
    %c0_8 = arith.constant 0 : index
    %c0_9 = arith.constant 0 : index
    %8 = vector.load %arg4[%c0_7, %c0_8, %c0_9] : memref<1x16x1xf32, #tpu.memory_space<vmem>>, vector<1x16x1xf32>
    %9 = vector.broadcast %8 : vector<1x16x1xf32> to vector<2x16x128xf32>
    %10 = arith.mulf %7, %9 : vector<2x16x128xf32>
    %c0_10 = arith.constant 0 : index
    %c0_11 = arith.constant 0 : index
    %c0_12 = arith.constant 0 : index
    %11 = vector.load %arg5[%c0_10, %c0_11, %c0_12] : memref<1x16x128xf32, #tpu.memory_space<vmem>>, vector<1x16x128xf32>
    %12 = vector.broadcast %11 : vector<1x16x128xf32> to vector<2x16x128xf32>
    %13 = arith.addf %10, %12 : vector<2x16x128xf32>
    %14 = vector.extract_strided_slice %13 {offsets = [0, 0, 0], sizes = [2, 16, 32], strides = [1, 1, 1]} : vector<2x16x128xf32> to vector<2x16x32xf32>
    %c0_13 = arith.constant 0 : index
    %c0_14 = arith.constant 0 : index
    %c0_15 = arith.constant 0 : index
    %15 = vector.load %arg6[%c0_13, %c0_14, %c0_15] : memref<2x16x32xf32, #tpu.memory_space<vmem>>, vector<2x16x32xf32>
    tpu.vector_store %arg6[%c0_13, %c0_14, %c0_15], %14 {strides = array<i32>} : memref<2x16x32xf32, #tpu.memory_space<vmem>>, vector<2x16x32xf32>,
    return
  }
  func.func @transform_0(%arg0: i32) -> (i32, i32, i32) {
    %c0_i32 = arith.constant 0 : i32
    %c0_i32_0 = arith.constant 0 : i32
    %c0_i32_1 = arith.constant 0 : i32
    return %arg0, %c0_i32, %c0_i32_0 : i32, i32, i32
  }
  func.func @transform_1(%arg0: i32) -> (i32, i32) {
    %c0_i32 = arith.constant 0 : i32
    %c0_i32_0 = arith.constant 0 : i32
    %c0_i32_1 = arith.constant 0 : i32
    return %c0_i32, %c0_i32_0 : i32, i32
  }
  func.func @transform_2(%arg0: i32) -> (i32, i32, i32) {
    %c0_i32 = arith.constant 0 : i32
    %c0_i32_0 = arith.constant 0 : i32
    %c0_i32_1 = arith.constant 0 : i32
    return %arg0, %c0_i32, %c0_i32_0 : i32, i32, i32
  }
  func.func @transform_3(%arg0: i32) -> (i32, i32, i32) {
    %c0_i32 = arith.constant 0 : i32
    %c0_i32_0 = arith.constant 0 : i32
    %c0_i32_1 = arith.constant 0 : i32
    %c0_i32_2 = arith.constant 0 : i32
    return %c0_i32, %c0_i32_0, %c0_i32_1 : i32, i32, i32
  }
  func.func @transform_4(%arg0: i32) -> (i32, i32, i32) {
    %c0_i32 = arith.constant 0 : i32
    %c0_i32_0 = arith.constant 0 : i32
    %c0_i32_1 = arith.constant 0 : i32
    %c0_i32_2 = arith.constant 0 : i32
    return %c0_i32, %c0_i32_0, %c0_i32_1 : i32, i32, i32
  }
  func.func @transform_5(%arg0: i32) -> (i32, i32, i32) {
    %c0_i32 = arith.constant 0 : i32
    %c0_i32_0 = arith.constant 0 : i32
    %c0_i32_1 = arith.constant 0 : i32
    return %arg0, %c0_i32, %c0_i32_0 : i32, i32, i32
  }
}

</mosaic_0001>

<llo_original>
// kernel: tpu_custom_call.1
$region0: #{tpu_custom_call.1}
  #allocation0 [shape = 'u32[]', space=smem, size = 0x4, offset = 0x4, fixed_abs, tag = 'smem constant byte address 0x4 - core index']
  #allocation1 [shape = 'u32[144,128]{1,0:T(1,128)}', space=vmem, size = 0x12000, scoped, tag = 'internal scratch']
  %s0 = inlined_call_operand.vmem [shape: f32[2,16,15], index: 0, kind: input, shape index: {}]
  %s1 = inlined_call_operand.vmem [shape: f32[15,128], index: 1, kind: input, shape index: {}]
  %s2 = inlined_call_operand.vmem [shape: f32[2,1,128], index: 2, kind: input, shape index: {}]
  %s3 = inlined_call_operand.vmem [shape: f32[1,16,1], index: 3, kind: input, shape index: {}]
  %s4 = inlined_call_operand.vmem [shape: f32[1,16,128], index: 4, kind: input, shape index: {}]
  %s5 = inlined_call_operand.hbm [shape: f32[2,16,32], index: 5, kind: output, shape index: {}]
  %s6 = sld [smem:[#allocation0]]
  $region30: #{tpu_custom_call.1} parent=0
    _
  %s8 = ssub.s32 1, %s6
  %s9 = scalar_select 0, %s8, %s6
  $region1: #{tpu_custom_call.1} parent=0
    #allocation2 [shape = 'u8[16384]{0}', space=vmem, size = 0x4000, scoped, tag = 'output window, operand 0, single buffered']
    #allocation3 [shape = 's32[1]{0}', space=sflag, size = 0x4, scoped, tag = 'scoped memory for tpu_custom_call.1']
    %10 = vsyncpa [#allocation3], 0
    // Predicated region
    $region2: #{tpu_custom_call.1} parent=1 // pred_check
      _
    $region3: #{tpu_custom_call.1} parent=1 // pred_check_branch
      %12 = sbr.rel (0) target = $region5
    $region4: #{tpu_custom_call.1} parent=1 // pred_region
      _
    $region5: #{tpu_custom_call.1} parent=1 // pred_fallthru
      _
    // Predicated region
    $region6: #{tpu_custom_call.1} parent=1 // pred_check
      _
    $region7: #{tpu_custom_call.1} parent=1 // pred_check_branch
      %14 = sbr.rel (0) target = $region9
    $region8: #{tpu_custom_call.1} parent=1 // pred_region
      _
    $region9: #{tpu_custom_call.1} parent=1 // pred_fallthru
      _
    // Predicated region
    $region10: #{tpu_custom_call.1} parent=1 // pred_check
      _
    $region11: #{tpu_custom_call.1} parent=1 // pred_check_branch
      %16 = sbr.rel (0) target = $region13
    $region12: #{tpu_custom_call.1} parent=1 // pred_region
      _
    $region13: #{tpu_custom_call.1} parent=1 // pred_fallthru
      _
    // Predicated region
    $region14: #{tpu_custom_call.1} parent=1 // pred_check
      _
    $region15: #{tpu_custom_call.1} parent=1 // pred_check_branch
      %18 = sbr.rel (0) target = $region17
    $region16: #{tpu_custom_call.1} parent=1 // pred_region
      _
    $region17: #{tpu_custom_call.1} parent=1 // pred_fallthru
      _
    // Predicated region
    $region18: #{tpu_custom_call.1} parent=1 // pred_check
      _
    $region19: #{tpu_custom_call.1} parent=1 // pred_check_branch
      %20 = sbr.rel (0) target = $region21
    $region20: #{tpu_custom_call.1} parent=1 // pred_region
      _
    $region21: #{tpu_custom_call.1} parent=1 // pred_fallthru
      _
    %v21 = vld [vmem:[%s0] sm:$0xff]
    %v22 = vld [vmem:[%s0 + $0x8] sm:$0xff]
    %v23 = vld [vmem:[%s0 + $0x10] sm:$0xff]
    %v24 = vld [vmem:[%s0 + $0x18] sm:$0xff]
    %v25 = vld [vmem:[%s1] sm:$0xff]
    %v26 = vld [vmem:[%s1 + $0x8] sm:$0x7f]
    %vm27 = vcmask 121856
    %v29 = vsel %vm27, %v21, 0
    %v32 = vsel %vm27, %v22, 0
    %v35 = vsel %vm27, %v23, 0
    %v38 = vsel %vm27, %v24, 0
    %vm40 = vcmask 1046528
    %v42 = vsel %vm40, %v26, 0
    %44 = vmatprep.subr.mxu0 0.0
    %45 = vmatpush1.msra.mxu0 %v25
    %46 = vmatprep.subr.mxu0 0.0
    %47 = vmatpush1.msra.mxu0 %v42
    %48 = vmatprep.subr.mxu0 0.0
    %49 = vmatpush1.msra.mxu0 0.0
    %50 = vmatprep.subr.mxu0 0.0
    %51 = vmatpush1.msra.mxu0 0.0
    %52 = vmatprep.subr.mxu0 0.0
    %53 = vmatpush1.msra.mxu0 0.0
    %54 = vmatprep.subr.mxu0 0.0
    %55 = vmatpush1.msra.mxu0 0.0
    %56 = vmatprep.subr.mxu0 0.0
    %57 = vmatpush1.msra.mxu0 0.0
    %58 = vmatprep.subr.mxu0 0.0
    %59 = vmatpush1.msra.mxu0 0.0
    %60 = vmatprep.subr.mxu0 0.0
    %61 = vmatpush1.msra.mxu0 0.0
    %62 = vmatprep.subr.mxu0 0.0
    %63 = vmatpush1.msra.mxu0 0.0
    %64 = vmatprep.subr.mxu0 0.0
    %65 = vmatpush1.msra.mxu0 0.0
    %66 = vmatprep.subr.mxu0 0.0
    %67 = vmatpush1.msra.mxu0 0.0
    %68 = vmatprep.subr.mxu0 0.0
    %69 = vmatpush1.msra.mxu0 0.0
    %70 = vmatprep.subr.mxu0 0.0
    %71 = vmatpush1.msra.mxu0 0.0
    %72 = vmatprep.subr.mxu0 0.0
    %73 = vmatpush1.msra.mxu0 0.0
    %74 = vmatprep.subr.mxu0 0.0
    %75 = vmatpush1.msra.mxu0 0.0
    %76 = vmatprep.subr.mxu0 0.0
    %77 = vmatpush1.msra.mxu0 0.0
    %78 = vmatprep.subr.mxu0 0.0
    %79 = vmatpush1.msra.mxu0 0.0
    %80 = vmatprep.subr.mxu0 0.0
    %81 = vmatpush1.msra.mxu0 0.0
    %82 = vmatprep.subr.mxu0 0.0
    %83 = vmatpush1.msra.mxu0 0.0
    %84 = vmatprep.subr.mxu0 0.0
    %85 = vmatpush1.msra.mxu0 0.0
    %86 = vmatprep.subr.mxu0 0.0
    %87 = vmatpush1.msra.mxu0 0.0
    %88 = vmatprep.subr.mxu0 0.0
    %89 = vmatpush1.msra.mxu0 0.0
    %90 = vmatprep.subr.mxu0 0.0
    %91 = vmatpush1.msra.mxu0 0.0
    %92 = vmatprep.subr.mxu0 0.0
    %93 = vmatpush1.msra.mxu0 0.0
    %94 = vmatprep.subr.mxu0 0.0
    %95 = vmatpush1.msra.mxu0 0.0
    %96 = vmatprep.subr.mxu0 0.0
    %97 = vmatpush1.msra.mxu0 0.0
    %98 = vmatprep.subr.mxu0 0.0
    %99 = vmatpush1.msra.mxu0 0.0
    %100 = vmatprep.subr.mxu0 0.0
    %101 = vmatpush1.msra.mxu0 0.0
    %102 = vmatprep.subr.mxu0 0.0
    %103 = vmatpush1.msra.mxu0 0.0
    %104 = vmatprep.subr.mxu0 0.0
    %105 = vmatpush1.msra.mxu0 0.0
    %106 = vmatprep.subr.mxu0 0.0
    %107 = vmatpush1.msra.mxu0 0.0
    %108 = vmatprep.mubr.f32.mxu0 0.0
    %109 = vmatmul.mubr.f32.gmra.mrb[0].mxu0 %v29
    %v110 = vpop.f32.mrb[0].mxu0
    %v111 = vadd.f32 0.0, %v110
    %v112 = vpop.f32.mrb[0].mxu0
    %113 = vmatprep.mubr.f32.mxu0 0.0
    %114 = vmatmul.mubr.f32.gmra.mrb[0].mxu0 %v32
    %v115 = vpop.f32.mrb[0].mxu0
    %v116 = vadd.f32 0.0, %v115
    %v117 = vpop.f32.mrb[0].mxu0
    %118 = vmatprep.mubr.f32.mxu0 0.0
    %119 = vmatmul.mubr.f32.gmra.mrb[0].mxu0 %v35
    %v120 = vpop.f32.mrb[0].mxu0
    %v121 = vadd.f32 0.0, %v120
    %v122 = vpop.f32.mrb[0].mxu0
    %123 = vmatprep.mubr.f32.mxu0 0.0
    %124 = vmatmul.mubr.f32.gmra.mrb[0].mxu0 %v38
    %v125 = vpop.f32.mrb[0].mxu0
    %v126 = vadd.f32 0.0, %v125
    %v127 = vpop.f32.mrb[0].mxu0
    %128 = vdwg.mxu0
    %v129 = vld [vmem:[%s2] sm:$0x1]
    %v130 = vld [vmem:[%s2 + $0x1] sm:$0x1]
    %v133 = vlaneseq
    %v134 = vshrl.u32 %v133, 7
    %v135 = vsub.s32 0, %v134
    %v136 = vrot.slane %v129, %v135
    %v137 = vlaneseq
    %v138 = vshrl.u32 %v137, 7
    %v139 = vsub.s32 0, %v138
    %v140 = vrot.slane %v130, %v139
    %v143 = vadd.f32 %v111, %v136
    %v144 = vadd.f32 %v116, %v136
    %v145 = vadd.f32 %v121, %v140
    %v146 = vadd.f32 %v126, %v140
    %v147 = vld [vmem:[%s3] sm:$0xff]
    %v148 = vld [vmem:[%s3 + $0x8] sm:$0xff]
    %150 = vset.pattern.permute.xlu0 0
    %151 = vperm.xlu0 %150, %v147
    %v152 = vpop.permute.xlu0 %151
    %155 = vset.pattern.permute.xlu0 0
    %156 = vperm.xlu0 %155, %v148
    %v157 = vpop.permute.xlu0 %156
    %v159 = vmul.f32 %v143, %v152
    %v160 = vmul.f32 %v144, %v157
    %v161 = vmul.f32 %v145, %v152
    %v162 = vmul.f32 %v146, %v157
    %v163 = vld [vmem:[%s4] sm:$0xff]
    %v164 = vld [vmem:[%s4 + $0x8] sm:$0xff]
    %v165 = vadd.f32 %v159, %v163
    %v166 = vadd.f32 %v160, %v164
    %v167 = vadd.f32 %v161, %v163
    %v168 = vadd.f32 %v162, %v164
    %vm169 = vcmask 261120
    %170 = vst.msk [vmem:[#allocation2] sm:$0xff] %vm169, %v165
    %171 = vst.msk [vmem:[#allocation2 + $0x8] sm:$0xff] %vm169, %v166
    %172 = vst.msk [vmem:[#allocation2 + $0x10] sm:$0xff] %vm169, %v167
    %173 = vst.msk [vmem:[#allocation2 + $0x18] sm:$0xff] %vm169, %v168
    // Predicated region
    $region22: #{tpu_custom_call.1} parent=1 // pred_check
      _
    $region23: #{tpu_custom_call.1} parent=1 // pred_check_branch
      %175 = sbr.rel (0) target = $region25
    $region24: #{tpu_custom_call.1} parent=1 // pred_region
      %s177 = ssub.s32 512, 512
      %178 = vsyncadd [#allocation3], %s177
      %s179 = sshll.u32 [#allocation2], 4
      %s180 = int_to_ptr.vmem [resolvable:$true] %s179
      %185 = dma.vmem_to_hbm [thread:$0]  %s180, 512, %s5, [#allocation3], 128, 128, 8
    $region25: #{tpu_custom_call.1} parent=1 // pred_fallthru
      _
    // Predicated region
    $region26: #{tpu_custom_call.1} parent=1 // pred_check
      _
    $region27: #{tpu_custom_call.1} parent=1 // pred_check_branch
      %187 = sbr.rel (0) target = $region29
    $region28: #{tpu_custom_call.1} parent=1 // pred_region
      %188 = dma.done [#allocation3], 512
    $region29: #{tpu_custom_call.1} parent=1 // pred_fallthru
      _
    %189 = vsyncpa [#allocation3], 1

</llo_original>
